<compile_context>
chip_gen: v7x
topology: tpu7x:2x2x1
jax: 0.10.0
libtpu: 0.0.40
codegen_flags: <defaults>
</compile_context>

<pallas_src>
import functools

import numpy as np
import jax
import jax.numpy as jnp
from jax import lax
from jax.experimental import pallas as pl
from jax.experimental.pallas import tpu as pltpu

EPS = float(jnp.finfo(jnp.float32).eps)
_EXP_CLAMP = 80.0   # exp-argument clamp; inert for L2-normalized features.


# ----------------------------------------------------------------------------
# Fused kernel: SogCLR contrastive loss + class-constraint penalty
# ----------------------------------------------------------------------------
def _sogclr_penalty_kernel(img_ref, txt_ref, pos_col_ref, pos_row_ref,
                           imgc_ref, txtc_ref, labels_ref, last_ref,
                           out_ref, *, inv_temp, inv_tau, tau, beta,
                           num_classes):
    f32 = jnp.float32

    # ---------------- contrastive branch ------------------------------------
    img = img_ref[...]                               # [B, Dp]
    txt = txt_ref[...]                               # [B, Dp]
    pos_col = pos_col_ref[...].astype(f32)           # [B, 1]  1.0 where slabel==1
    pos_row = pos_row_ref[...].astype(f32)           # [1, B]
    B = img.shape[0]

    # Hoisted scalars (kept as [1,1] to stay >= 2-D for Mosaic).
    num_pos = jnp.sum(pos_col, keepdims=True)        # [1,1]  P
    num_neg = f32(B) - num_pos                       # [1,1]  Q
    inv_num_pos = 1.0 / num_pos
    inv_num_neg = 1.0 / num_neg

    # diag[i] = <img_i, txt_i> as a row-wise dot (no [B,B] eye/iota machinery).
    diag = jnp.sum(img.astype(f32) * txt.astype(f32), axis=1, keepdims=True)

    # Rank-1 mask factors folded straight into the select predicate:
    # active rows = positives, active cols = negatives.
    active = jnp.logical_and(pos_col > 0.5, pos_row < 0.5)       # [B, B] bool

    def side(lhs, rhs):
        # sim[i, j] = <lhs_i, rhs_j>  (MXU, f32 accumulate)
        sim = lax.dot_general(lhs, rhs, (((1,), (1,)), ((), ())),
                              preferred_element_type=f32)        # [B, B]
        diff = sim - diag
        arg = jnp.minimum(diff * inv_temp, _EXP_CLAMP)
        e = jnp.where(active, jnp.exp(arg), 0.0)
        s1 = jnp.sum(e, axis=1, keepdims=True)                   # [B, 1]
        s2 = jnp.sum(e * diff, axis=1, keepdims=True)            # [B, 1]
        g = s1 * inv_num_neg                                     # == mean exp
        row_loss = s2 * pl.reciprocal(g + EPS, approx=True) * inv_num_neg
        return jnp.sum(row_loss * pos_col, keepdims=True) * inv_num_pos  # [1,1]

    # image side: rows = images (positives), cols = texts (negatives)
    im_part = side(img, txt)
    # text side on sim^T: rows = texts (positives), cols = images (negatives)
    tx_part = side(txt, img)
    contrastive = im_part + tx_part                               # [1,1]

    # ---------------- class-constraint penalty ------------------------------
    imgc = imgc_ref[...]                              # [Bc, Dcp]
    txtc = txtc_ref[...]                              # [Cpad, Dcp]
    labels = labels_ref[...]                          # [Bc, 1] int32
    last = last_ref[...]                              # [Bc, 1]

    logits = lax.dot_general(imgc, txtc, (((1,), (1,)), ((), ())),
                             preferred_element_type=f32) * inv_tau   # [Bc,Cpad]
    Bc, Cpad = logits.shape
    cls_idx = lax.broadcasted_iota(jnp.int32, (Bc, Cpad), 1)
    logits = jnp.where(cls_idx < num_classes, logits, -1e30)   # mask padded cls

    # one-hot built in-kernel (no [Bc,Cpad] f32 input through HBM)
    onehot = (cls_idx == labels).astype(f32)                         # [Bc,Cpad]

    # per-sample cross entropy (stable logsumexp)
    m = jnp.max(logits, axis=1, keepdims=True)
    lse = jnp.log(jnp.sum(jnp.exp(logits - m), axis=1, keepdims=True)) + m
    picked = jnp.sum(onehot * logits, axis=1, keepdims=True)
    ce = lse - picked                                                # [Bc, 1]

    counts = jnp.sum(onehot, axis=0, keepdims=True)                  # [1, Cpad]
    present = counts > 0.0
    inv_cnt = pl.reciprocal(jnp.where(present, counts, 1.0), approx=True)
    mean_cls = jnp.sum(onehot * ce, axis=0, keepdims=True) * inv_cnt
    mean_last = jnp.sum(onehot * last, axis=0, keepdims=True) * inv_cnt
    constraint = mean_cls - mean_last        # == u[unique_labels] on first call

    gated = jnp.where(constraint > 0.0, f32(beta), 0.0) * mean_cls * tau
    n_present = jnp.sum(present.astype(f32), keepdims=True)          # [1,1]
    penalty = jnp.sum(jnp.where(present, gated, 0.0), keepdims=True) / n_present

    out_ref[...] = contrastive + penalty


# ----------------------------------------------------------------------------
# Wrapper: masks, lane-dense padding, single pallas_call
# ----------------------------------------------------------------------------
def _pad_lanes(x, multiple=128):
    """Zero-pad the last (lane) dim up to a multiple of `multiple`."""
    pad = (-x.shape[-1]) % multiple
    if pad == 0:
        return x
    return jnp.pad(x, [(0, 0)] * (x.ndim - 1) + [(0, pad)])


def sogclr_penalty_l1_forward(image_features, text_features, slabel,
                              img_feas_c, txt_feas_c, labels_c, last_loss_c,
                              *, temperature=0.07, tau=0.1, beta=40.0,
                              num_ct_class=None):
    B, _ = image_features.shape
    Bc, _ = img_feas_c.shape
    C = int(txt_feas_c.shape[0]) if num_ct_class is None else int(num_ct_class)

    pos = (slabel.reshape(-1) == 1).astype(jnp.float32)
    pos_col = pos.reshape(B, 1)
    pos_row = pos.reshape(1, B)

    # Lane-dense padding of feature dims (zeros are inert in all dots / sums).
    img = _pad_lanes(image_features)
    txt = _pad_lanes(text_features)
    imgc = _pad_lanes(img_feas_c)
    txtc = _pad_lanes(txt_feas_c)

    # Pad the class axis to a lane-dense width; padded classes are masked to a
    # large negative logit inside the kernel so the softmax is unchanged.
    Cpad = ((C + 127) // 128) * 128
    if txtc.shape[0] < Cpad:
        txtc = jnp.pad(txtc, ((0, Cpad - txtc.shape[0]), (0, 0)))
    labels_col = labels_c.reshape(Bc, 1).astype(jnp.int32)
    last_col = last_loss_c.reshape(Bc, 1).astype(jnp.float32)

    Dp = img.shape[1]
    Dcp = imgc.shape[1]

    kernel = functools.partial(
        _sogclr_penalty_kernel,
        inv_temp=float(1.0 / temperature),
        inv_tau=float(1.0 / tau),
        tau=float(tau),
        beta=float(beta),
        num_classes=C,
    )

    out = pl.pallas_call(
        kernel,
        out_shape=jax.ShapeDtypeStruct((1, 1), jnp.float32),
        grid=(1,),
        in_specs=[
            pl.BlockSpec((B, Dp), lambda i: (0, 0)),
            pl.BlockSpec((B, Dp), lambda i: (0, 0)),
            pl.BlockSpec((B, 1), lambda i: (0, 0)),
            pl.BlockSpec((1, B), lambda i: (0, 0)),
            pl.BlockSpec((Bc, Dcp), lambda i: (0, 0)),
            pl.BlockSpec((Cpad, Dcp), lambda i: (0, 0)),
            pl.BlockSpec((Bc, 1), lambda i: (0, 0)),
            pl.BlockSpec((Bc, 1), lambda i: (0, 0)),
        ],
        out_specs=pl.BlockSpec((1, 1), lambda i: (0, 0)),
        compiler_params=pltpu.CompilerParams(
            dimension_semantics=("arbitrary",),
            vmem_limit_bytes=48 * 1024 * 1024),
    )(img, txt, pos_col, pos_row, imgc, txtc, labels_col, last_col)

    return out[0, 0]


# ----------------------------------------------------------------------------
# Pure-JAX eager reference (mirrors the PyTorch forward, epoch==0 path)
# ----------------------------------------------------------------------------
def _reference_forward(image_features, text_features, slabel,
                       img_feas_c, txt_feas_c, labels_c, last_loss_c,
                       *, temperature, tau, beta, num_ct_class):
    eps = jnp.finfo(jnp.float32).eps
    sim = image_features @ text_features.T
    diag = jnp.diag(sim)
    pos_mask = np.asarray(slabel.reshape(-1) == 1)
    neg_mask = ~pos_mask
    image_diffs = (sim - diag[:, None])[pos_mask][:, neg_mask]
    text_diffs = (sim - diag[None, :])[neg_mask][:, pos_mask]
    exp_i = jnp.exp(image_diffs / temperature)
    exp_t = jnp.exp(text_diffs / temperature)
    g_I = jnp.mean(exp_i, axis=1, keepdims=True)
    g_T = jnp.mean(exp_t, axis=0, keepdims=True)
    w_i = exp_i / (g_I + eps)
    w_t = exp_t / (g_T + eps)
    contrastive = (jnp.mean(w_i * image_diffs, axis=1).mean()
                   + jnp.mean(w_t * text_diffs, axis=0).mean())

    logits = (1.0 / tau) * img_feas_c @ txt_feas_c.T
    ce = (jax.nn.logsumexp(logits, axis=1)
          - logits[jnp.arange(logits.shape[0]), labels_c])
    sum_cls = jnp.zeros(num_ct_class).at[labels_c].add(ce)
    cnt_cls = jnp.zeros(num_ct_class).at[labels_c].add(1.0)
    sum_last = jnp.zeros(num_ct_class).at[labels_c].add(last_loss_c)
    present = np.asarray(cnt_cls > 0)
    mean_cls = sum_cls[present] / cnt_cls[present]
    mean_last = sum_last[present] / cnt_cls[present]
    gated = jnp.where((mean_cls - mean_last) > 0, beta, 0.0) * mean_cls * tau
    return contrastive + gated.mean()


if __name__ == "__main__":
    key = jax.random.PRNGKey(0)
    k1, k2, k3, k4, k5, k6 = jax.random.split(key, 6)

    def l2norm(x):
        return x / jnp.linalg.norm(x, axis=-1, keepdims=True)

    # contrastive-branch inputs (CLIP-style L2-normalized features: the
    # reference loss assumes this; unnormalized features overflow the exp)
    B, D = 8, 32
    image_features = l2norm(jax.random.normal(k1, (B, D), jnp.float32))
    text_features = l2norm(jax.random.normal(k2, (B, D), jnp.float32))
    slabel = jnp.array([1, 0, 1, 1, 0, 0, 1, 0], jnp.int32).reshape(B, 1)

    # penalty-branch inputs
    Bc, Dc, C = 16, 32, 5          # C == num_ct_class
    img_feas_c = l2norm(jax.random.normal(k3, (Bc, Dc), jnp.float32))
    txt_feas_c = l2norm(jax.random.normal(k4, (C, Dc), jnp.float32))
    labels_c = jax.random.randint(k5, (Bc,), 0, C, jnp.int32)
    last_loss_c = jax.random.uniform(k6, (Bc,), jnp.float32)

    loss = sogclr_penalty_l1_forward(
        image_features, text_features, slabel,
        img_feas_c, txt_feas_c, labels_c, last_loss_c,
        temperature=0.07, tau=0.1, beta=40.0)
    loss = jax.block_until_ready(loss)

    ref = _reference_forward(
        image_features, text_features, slabel,
        img_feas_c, txt_feas_c, labels_c, last_loss_c,
        temperature=0.07, tau=0.1, beta=40.0, num_ct_class=C)

    assert jnp.isfinite(loss), "loss is not finite"
    assert jnp.allclose(loss, ref, rtol=1e-2, atol=1e-2), (
        f"kernel={float(loss)} reference={float(ref)}")
    print("KERNEL_OK")
</pallas_src>

<mosaic_0001>
module attributes {stable_mosaic.version = 11 : i64} {
  func.func @_sogclr_penalty_kernel(%arg0: i32, %arg1: memref<8x128xf32, #tpu.memory_space<vmem>>, %arg2: memref<8x128xf32, #tpu.memory_space<vmem>>, %arg3: memref<8x1xf32, #tpu.memory_space<vmem>>, %arg4: memref<1x8xf32, #tpu.memory_space<vmem>>, %arg5: memref<16x128xf32, #tpu.memory_space<vmem>>, %arg6: memref<128x128xf32, #tpu.memory_space<vmem>>, %arg7: memref<16x1xi32, #tpu.memory_space<vmem>>, %arg8: memref<16x1xf32, #tpu.memory_space<vmem>>, %arg9: memref<1x1xf32, #tpu.memory_space<vmem>>) attributes {dimension_semantics = [#tpu.dimension_semantics<arbitrary>], iteration_bounds = array<i64: 1>, scalar_prefetch = 0 : i64, scratch_operands = 0 : i64, tpu.core_type = #tpu.core_type<tc>, window_params = [{pipeline_mode = #tpu.pipeline_mode<synchronous>, transform_indices = @transform_0, window_bounds = array<i64: 8, 128>}, {pipeline_mode = #tpu.pipeline_mode<synchronous>, transform_indices = @transform_1, window_bounds = array<i64: 8, 128>}, {pipeline_mode = #tpu.pipeline_mode<synchronous>, transform_indices = @transform_2, window_bounds = array<i64: 8, 1>}, {pipeline_mode = #tpu.pipeline_mode<synchronous>, transform_indices = @transform_3, window_bounds = array<i64: 1, 8>}, {pipeline_mode = #tpu.pipeline_mode<synchronous>, transform_indices = @transform_4, window_bounds = array<i64: 16, 128>}, {pipeline_mode = #tpu.pipeline_mode<synchronous>, transform_indices = @transform_5, window_bounds = array<i64: 128, 128>}, {pipeline_mode = #tpu.pipeline_mode<synchronous>, transform_indices = @transform_6, window_bounds = array<i64: 16, 1>}, {pipeline_mode = #tpu.pipeline_mode<synchronous>, transform_indices = @transform_7, window_bounds = array<i64: 16, 1>}, {pipeline_mode = #tpu.pipeline_mode<synchronous>, transform_indices = @transform_8, window_bounds = array<i64: 1, 1>}]} {
    %c0 = arith.constant 0 : index
    %c0_0 = arith.constant 0 : index
    %0 = vector.load %arg1[%c0, %c0_0] : memref<8x128xf32, #tpu.memory_space<vmem>>, vector<8x128xf32>
    %c0_1 = arith.constant 0 : index
    %c0_2 = arith.constant 0 : index
    %1 = vector.load %arg2[%c0_1, %c0_2] : memref<8x128xf32, #tpu.memory_space<vmem>>, vector<8x128xf32>
    %c0_3 = arith.constant 0 : index
    %c0_4 = arith.constant 0 : index
    %2 = vector.load %arg3[%c0_3, %c0_4] : memref<8x1xf32, #tpu.memory_space<vmem>>, vector<8x1xf32>
    %c0_5 = arith.constant 0 : index
    %c0_6 = arith.constant 0 : index
    %3 = vector.load %arg4[%c0_5, %c0_6] : memref<1x8xf32, #tpu.memory_space<vmem>>, vector<1x8xf32>
    %4 = vector.shape_cast %2 : vector<8x1xf32> to vector<1x8x1xf32>
    %cst = arith.constant dense<0.000000e+00> : vector<1xf32>
    %5 = vector.multi_reduction <add>, %4, %cst [1, 2] : vector<1x8x1xf32> to vector<1xf32>
    %6 = vector.shape_cast %5 : vector<1xf32> to vector<1x1x1xf32>
    %7 = vector.extract %6[0, 0, 0] : f32 from vector<1x1x1xf32>
    %8 = vector.broadcast %7 : f32 to vector<1x1xf32>
    %cst_7 = arith.constant 8.000000e+00 : f32
    %9 = vector.broadcast %cst_7 : f32 to vector<1x1xf32>
    %10 = arith.subf %9, %8 : vector<1x1xf32>
    %cst_8 = arith.constant 1.000000e+00 : f32
    %11 = vector.broadcast %cst_8 : f32 to vector<1x1xf32>
    %12 = arith.divf %11, %8 : vector<1x1xf32>
    %cst_9 = arith.constant 1.000000e+00 : f32
    %13 = vector.broadcast %cst_9 : f32 to vector<1x1xf32>
    %14 = arith.divf %13, %10 : vector<1x1xf32>
    %15 = arith.mulf %0, %1 : vector<8x128xf32>
    %cst_10 = arith.constant dense<0.000000e+00> : vector<8xf32>
    %16 = vector.multi_reduction <add>, %15, %cst_10 [1] : vector<8x128xf32> to vector<8xf32>
    %17 = vector.shape_cast %16 : vector<8xf32> to vector<8x1xf32>
    %cst_11 = arith.constant 5.000000e-01 : f32
    %18 = vector.broadcast %cst_11 : f32 to vector<8x1xf32>
    %19 = arith.cmpf ogt, %2, %18 : vector<8x1xf32>
    %cst_12 = arith.constant 5.000000e-01 : f32
    %20 = vector.broadcast %cst_12 : f32 to vector<1x8xf32>
    %21 = arith.cmpf olt, %3, %20 : vector<1x8xf32>
    %22 = vector.broadcast %19 : vector<8x1xi1> to vector<8x8xi1>
    %23 = vector.broadcast %21 : vector<1x8xi1> to vector<8x8xi1>
    %24 = arith.andi %22, %23 : vector<8x8xi1>
    %cst_13 = arith.constant dense<0.000000e+00> : vector<8x8xf32>
    %25 = tpu.matmul %0, %1, %cst_13 {dimension_numbers = #tpu.dot_dimension_numbers<[1], [1], [0], [0], [0, 0, 1, 0], [], []>} : vector<8x128xf32>, vector<8x128xf32>, vector<8x8xf32> -> vector<8x8xf32>
    %26 = vector.broadcast %17 : vector<8x1xf32> to vector<8x8xf32>
    %27 = arith.subf %25, %26 : vector<8x8xf32>
    %cst_14 = arith.constant 14.2857141 : f32
    %28 = vector.broadcast %cst_14 : f32 to vector<8x8xf32>
    %29 = arith.mulf %27, %28 : vector<8x8xf32>
    %cst_15 = arith.constant 8.000000e+01 : f32
    %30 = vector.broadcast %cst_15 : f32 to vector<8x8xf32>
    %31 = arith.minimumf %29, %30 : vector<8x8xf32>
    %32 = math.exp %31 : vector<8x8xf32>
    %cst_16 = arith.constant 0.000000e+00 : f32
    %33 = vector.broadcast %cst_16 : f32 to vector<8x8xf32>
    %34 = arith.select %24, %32, %33 : vector<8x8xi1>, vector<8x8xf32>
    %cst_17 = arith.constant dense<0.000000e+00> : vector<8xf32>
    %35 = vector.multi_reduction <add>, %34, %cst_17 [1] : vector<8x8xf32> to vector<8xf32>
    %36 = vector.shape_cast %35 : vector<8xf32> to vector<8x1xf32>
    %37 = arith.mulf %34, %27 : vector<8x8xf32>
    %cst_18 = arith.constant dense<0.000000e+00> : vector<8xf32>
    %38 = vector.multi_reduction <add>, %37, %cst_18 [1] : vector<8x8xf32> to vector<8xf32>
    %39 = vector.shape_cast %38 : vector<8xf32> to vector<8x1xf32>
    %40 = vector.broadcast %14 : vector<1x1xf32> to vector<8x1xf32>
    %41 = arith.mulf %36, %40 : vector<8x1xf32>
    %cst_19 = arith.constant 1.1920929E-7 : f32
    %42 = vector.broadcast %cst_19 : f32 to vector<8x1xf32>
    %43 = arith.addf %41, %42 : vector<8x1xf32>
    %44 = tpu.reciprocal %43 {approx = true} : vector<8x1xf32> -> vector<8x1xf32>
    %45 = arith.mulf %39, %44 : vector<8x1xf32>
    %46 = vector.broadcast %14 : vector<1x1xf32> to vector<8x1xf32>
    %47 = arith.mulf %45, %46 : vector<8x1xf32>
    %48 = arith.mulf %47, %2 : vector<8x1xf32>
    %49 = vector.shape_cast %48 : vector<8x1xf32> to vector<1x8x1xf32>
    %cst_20 = arith.constant dense<0.000000e+00> : vector<1xf32>
    %50 = vector.multi_reduction <add>, %49, %cst_20 [1, 2] : vector<1x8x1xf32> to vector<1xf32>
    %51 = vector.shape_cast %50 : vector<1xf32> to vector<1x1x1xf32>
    %52 = vector.extract %51[0, 0, 0] : f32 from vector<1x1x1xf32>
    %53 = vector.broadcast %52 : f32 to vector<1x1xf32>
    %54 = arith.mulf %53, %12 : vector<1x1xf32>
    %cst_21 = arith.constant dense<0.000000e+00> : vector<8x8xf32>
    %55 = tpu.matmul %1, %0, %cst_21 {dimension_numbers = #tpu.dot_dimension_numbers<[1], [1], [0], [0], [0, 0, 1, 0], [], []>} : vector<8x128xf32>, vector<8x128xf32>, vector<8x8xf32> -> vector<8x8xf32>
    %56 = vector.broadcast %17 : vector<8x1xf32> to vector<8x8xf32>
    %57 = arith.subf %55, %56 : vector<8x8xf32>
    %cst_22 = arith.constant 14.2857141 : f32
    %58 = vector.broadcast %cst_22 : f32 to vector<8x8xf32>
    %59 = arith.mulf %57, %58 : vector<8x8xf32>
    %cst_23 = arith.constant 8.000000e+01 : f32
    %60 = vector.broadcast %cst_23 : f32 to vector<8x8xf32>
    %61 = arith.minimumf %59, %60 : vector<8x8xf32>
    %62 = math.exp %61 : vector<8x8xf32>
    %cst_24 = arith.constant 0.000000e+00 : f32
    %63 = vector.broadcast %cst_24 : f32 to vector<8x8xf32>
    %64 = arith.select %24, %62, %63 : vector<8x8xi1>, vector<8x8xf32>
    %cst_25 = arith.constant dense<0.000000e+00> : vector<8xf32>
    %65 = vector.multi_reduction <add>, %64, %cst_25 [1] : vector<8x8xf32> to vector<8xf32>
    %66 = vector.shape_cast %65 : vector<8xf32> to vector<8x1xf32>
    %67 = arith.mulf %64, %57 : vector<8x8xf32>
    %cst_26 = arith.constant dense<0.000000e+00> : vector<8xf32>
    %68 = vector.multi_reduction <add>, %67, %cst_26 [1] : vector<8x8xf32> to vector<8xf32>
    %69 = vector.shape_cast %68 : vector<8xf32> to vector<8x1xf32>
    %70 = vector.broadcast %14 : vector<1x1xf32> to vector<8x1xf32>
    %71 = arith.mulf %66, %70 : vector<8x1xf32>
    %cst_27 = arith.constant 1.1920929E-7 : f32
    %72 = vector.broadcast %cst_27 : f32 to vector<8x1xf32>
    %73 = arith.addf %71, %72 : vector<8x1xf32>
    %74 = tpu.reciprocal %73 {approx = true} : vector<8x1xf32> -> vector<8x1xf32>
    %75 = arith.mulf %69, %74 : vector<8x1xf32>
    %76 = vector.broadcast %14 : vector<1x1xf32> to vector<8x1xf32>
    %77 = arith.mulf %75, %76 : vector<8x1xf32>
    %78 = arith.mulf %77, %2 : vector<8x1xf32>
    %79 = vector.shape_cast %78 : vector<8x1xf32> to vector<1x8x1xf32>
    %cst_28 = arith.constant dense<0.000000e+00> : vector<1xf32>
    %80 = vector.multi_reduction <add>, %79, %cst_28 [1, 2] : vector<1x8x1xf32> to vector<1xf32>
    %81 = vector.shape_cast %80 : vector<1xf32> to vector<1x1x1xf32>
    %82 = vector.extract %81[0, 0, 0] : f32 from vector<1x1x1xf32>
    %83 = vector.broadcast %82 : f32 to vector<1x1xf32>
    %84 = arith.mulf %83, %12 : vector<1x1xf32>
    %85 = arith.addf %54, %84 : vector<1x1xf32>
    %c0_29 = arith.constant 0 : index
    %c0_30 = arith.constant 0 : index
    %86 = vector.load %arg5[%c0_29, %c0_30] : memref<16x128xf32, #tpu.memory_space<vmem>>, vector<16x128xf32>
    %c0_31 = arith.constant 0 : index
    %c0_32 = arith.constant 0 : index
    %87 = vector.load %arg6[%c0_31, %c0_32] : memref<128x128xf32, #tpu.memory_space<vmem>>, vector<128x128xf32>
    %c0_33 = arith.constant 0 : index
    %c0_34 = arith.constant 0 : index
    %88 = vector.load %arg7[%c0_33, %c0_34] : memref<16x1xi32, #tpu.memory_space<vmem>>, vector<16x1xi32>
    %c0_35 = arith.constant 0 : index
    %c0_36 = arith.constant 0 : index
    %89 = vector.load %arg8[%c0_35, %c0_36] : memref<16x1xf32, #tpu.memory_space<vmem>>, vector<16x1xf32>
    %cst_37 = arith.constant dense<0.000000e+00> : vector<16x128xf32>
    %90 = tpu.matmul %86, %87, %cst_37 {dimension_numbers = #tpu.dot_dimension_numbers<[1], [1], [0], [0], [0, 0, 1, 0], [], []>} : vector<16x128xf32>, vector<128x128xf32>, vector<16x128xf32> -> vector<16x128xf32>
    %cst_38 = arith.constant 1.000000e+01 : f32
    %91 = vector.broadcast %cst_38 : f32 to vector<16x128xf32>
    %92 = arith.mulf %90, %91 : vector<16x128xf32>
    %93 = tpu.iota {dimensions = array<i32: 1>} : vector<16x128xi32>
    %c5_i32 = arith.constant 5 : i32
    %94 = vector.broadcast %c5_i32 : i32 to vector<16x128xi32>
    %95 = arith.cmpi slt, %93, %94 : vector<16x128xi32>
    %cst_39 = arith.constant -1.000000e+30 : f32
    %96 = vector.broadcast %cst_39 : f32 to vector<16x128xf32>
    %97 = arith.select %95, %92, %96 : vector<16x128xi1>, vector<16x128xf32>
    %98 = vector.broadcast %88 : vector<16x1xi32> to vector<16x128xi32>
    %99 = arith.cmpi eq, %93, %98 : vector<16x128xi32>
    %100 = arith.extui %99 : vector<16x128xi1> to vector<16x128xi32>
    %101 = arith.sitofp %100 : vector<16x128xi32> to vector<16x128xf32>
    %cst_40 = arith.constant dense<0xFF800000> : vector<16xf32>
    %102 = vector.multi_reduction <maximumf>, %97, %cst_40 [1] : vector<16x128xf32> to vector<16xf32>
    %103 = vector.shape_cast %102 : vector<16xf32> to vector<16x1xf32>
    %104 = vector.broadcast %103 : vector<16x1xf32> to vector<16x128xf32>
    %105 = arith.subf %97, %104 : vector<16x128xf32>
    %106 = math.exp %105 : vector<16x128xf32>
    %cst_41 = arith.constant dense<0.000000e+00> : vector<16xf32>
    %107 = vector.multi_reduction <add>, %106, %cst_41 [1] : vector<16x128xf32> to vector<16xf32>
    %108 = vector.shape_cast %107 : vector<16xf32> to vector<16x1xf32>
    %109 = math.log %108 : vector<16x1xf32>
    %110 = arith.addf %109, %103 : vector<16x1xf32>
    %111 = arith.mulf %101, %97 : vector<16x128xf32>
    %cst_42 = arith.constant dense<0.000000e+00> : vector<16xf32>
    %112 = vector.multi_reduction <add>, %111, %cst_42 [1] : vector<16x128xf32> to vector<16xf32>
    %113 = vector.shape_cast %112 : vector<16xf32> to vector<16x1xf32>
    %114 = arith.subf %110, %113 : vector<16x1xf32>
    %cst_43 = arith.constant dense<0.000000e+00> : vector<128xf32>
    %115 = vector.multi_reduction <add>, %101, %cst_43 [0] : vector<16x128xf32> to vector<128xf32>
    %116 = vector.shape_cast %115 : vector<128xf32> to vector<1x128xf32>
    %cst_44 = arith.constant 0.000000e+00 : f32
    %117 = vector.broadcast %cst_44 : f32 to vector<1x128xf32>
    %118 = arith.cmpf ogt, %116, %117 : vector<1x128xf32>
    %cst_45 = arith.constant 1.000000e+00 : f32
    %119 = vector.broadcast %cst_45 : f32 to vector<1x128xf32>
    %120 = arith.select %118, %116, %119 : vector<1x128xi1>, vector<1x128xf32>
    %121 = tpu.reciprocal %120 {approx = true} : vector<1x128xf32> -> vector<1x128xf32>
    %122 = vector.broadcast %114 : vector<16x1xf32> to vector<16x128xf32>
    %123 = arith.mulf %101, %122 : vector<16x128xf32>
    %cst_46 = arith.constant dense<0.000000e+00> : vector<128xf32>
    %124 = vector.multi_reduction <add>, %123, %cst_46 [0] : vector<16x128xf32> to vector<128xf32>
    %125 = vector.shape_cast %124 : vector<128xf32> to vector<1x128xf32>
    %126 = arith.mulf %125, %121 : vector<1x128xf32>
    %127 = vector.broadcast %89 : vector<16x1xf32> to vector<16x128xf32>
    %128 = arith.mulf %101, %127 : vector<16x128xf32>
    %cst_47 = arith.constant dense<0.000000e+00> : vector<128xf32>
    %129 = vector.multi_reduction <add>, %128, %cst_47 [0] : vector<16x128xf32> to vector<128xf32>
    %130 = vector.shape_cast %129 : vector<128xf32> to vector<1x128xf32>
    %131 = arith.mulf %130, %121 : vector<1x128xf32>
    %132 = arith.subf %126, %131 : vector<1x128xf32>
    %cst_48 = arith.constant 0.000000e+00 : f32
    %133 = vector.broadcast %cst_48 : f32 to vector<1x128xf32>
    %134 = arith.cmpf ogt, %132, %133 : vector<1x128xf32>
    %cst_49 = arith.constant 4.000000e+01 : f32
    %cst_50 = arith.constant 0.000000e+00 : f32
    %135 = vector.broadcast %cst_49 : f32 to vector<1x128xf32>
    %136 = vector.broadcast %cst_50 : f32 to vector<1x128xf32>
    %137 = arith.select %134, %135, %136 : vector<1x128xi1>, vector<1x128xf32>
    %138 = arith.mulf %137, %126 : vector<1x128xf32>
    %cst_51 = arith.constant 1.000000e-01 : f32
    %139 = vector.broadcast %cst_51 : f32 to vector<1x128xf32>
    %140 = arith.mulf %138, %139 : vector<1x128xf32>
    %141 = arith.extui %118 : vector<1x128xi1> to vector<1x128xi32>
    %142 = arith.sitofp %141 : vector<1x128xi32> to vector<1x128xf32>
    %143 = vector.shape_cast %142 : vector<1x128xf32> to vector<1x1x128xf32>
    %cst_52 = arith.constant dense<0.000000e+00> : vector<1xf32>
    %144 = vector.multi_reduction <add>, %143, %cst_52 [1, 2] : vector<1x1x128xf32> to vector<1xf32>
    %145 = vector.shape_cast %144 : vector<1xf32> to vector<1x1x1xf32>
    %146 = vector.extract %145[0, 0, 0] : f32 from vector<1x1x1xf32>
    %147 = vector.broadcast %146 : f32 to vector<1x1xf32>
    %cst_53 = arith.constant 0.000000e+00 : f32
    %148 = vector.broadcast %cst_53 : f32 to vector<1x128xf32>
    %149 = arith.select %118, %140, %148 : vector<1x128xi1>, vector<1x128xf32>
    %150 = vector.shape_cast %149 : vector<1x128xf32> to vector<1x1x128xf32>
    %cst_54 = arith.constant dense<0.000000e+00> : vector<1xf32>
    %151 = vector.multi_reduction <add>, %150, %cst_54 [1, 2] : vector<1x1x128xf32> to vector<1xf32>
    %152 = vector.shape_cast %151 : vector<1xf32> to vector<1x1x1xf32>
    %153 = vector.extract %152[0, 0, 0] : f32 from vector<1x1x1xf32>
    %154 = vector.broadcast %153 : f32 to vector<1x1xf32>
    %155 = arith.divf %154, %147 : vector<1x1xf32>
    %156 = arith.addf %85, %155 : vector<1x1xf32>
    %c0_55 = arith.constant 0 : index
    %c0_56 = arith.constant 0 : index
    %157 = vector.load %arg9[%c0_55, %c0_56] : memref<1x1xf32, #tpu.memory_space<vmem>>, vector<1x1xf32>
    tpu.vector_store %arg9[%c0_55, %c0_56], %156 {strides = array<i32>} : memref<1x1xf32, #tpu.memory_space<vmem>>, vector<1x1xf32>,
    return
  }
  func.func @transform_0(%arg0: i32) -> (i32, i32) {
    %c0_i32 = arith.constant 0 : i32
    %c0_i32_0 = arith.constant 0 : i32
    %c0_i32_1 = arith.constant 0 : i32
    return %c0_i32, %c0_i32_0 : i32, i32
  }
  func.func @transform_1(%arg0: i32) -> (i32, i32) {
    %c0_i32 = arith.constant 0 : i32
    %c0_i32_0 = arith.constant 0 : i32
    %c0_i32_1 = arith.constant 0 : i32
    return %c0_i32, %c0_i32_0 : i32, i32
  }
  func.func @transform_2(%arg0: i32) -> (i32, i32) {
    %c0_i32 = arith.constant 0 : i32
    %c0_i32_0 = arith.constant 0 : i32
    %c0_i32_1 = arith.constant 0 : i32
    return %c0_i32, %c0_i32_0 : i32, i32
  }
  func.func @transform_3(%arg0: i32) -> (i32, i32) {
    %c0_i32 = arith.constant 0 : i32
    %c0_i32_0 = arith.constant 0 : i32
    %c0_i32_1 = arith.constant 0 : i32
    return %c0_i32, %c0_i32_0 : i32, i32
  }
  func.func @transform_4(%arg0: i32) -> (i32, i32) {
    %c0_i32 = arith.constant 0 : i32
    %c0_i32_0 = arith.constant 0 : i32
    %c0_i32_1 = arith.constant 0 : i32
    return %c0_i32, %c0_i32_0 : i32, i32
  }
  func.func @transform_5(%arg0: i32) -> (i32, i32) {
    %c0_i32 = arith.constant 0 : i32
    %c0_i32_0 = arith.constant 0 : i32
    %c0_i32_1 = arith.constant 0 : i32
    return %c0_i32, %c0_i32_0 : i32, i32
  }
  func.func @transform_6(%arg0: i32) -> (i32, i32) {
    %c0_i32 = arith.constant 0 : i32
    %c0_i32_0 = arith.constant 0 : i32
    %c0_i32_1 = arith.constant 0 : i32
    return %c0_i32, %c0_i32_0 : i32, i32
  }
  func.func @transform_7(%arg0: i32) -> (i32, i32) {
    %c0_i32 = arith.constant 0 : i32
    %c0_i32_0 = arith.constant 0 : i32
    %c0_i32_1 = arith.constant 0 : i32
    return %c0_i32, %c0_i32_0 : i32, i32
  }
  func.func @transform_8(%arg0: i32) -> (i32, i32) {
    %c0_i32 = arith.constant 0 : i32
    %c0_i32_0 = arith.constant 0 : i32
    %c0_i32_1 = arith.constant 0 : i32
    return %c0_i32, %c0_i32_0 : i32, i32
  }
}

</mosaic_0001>

<llo_original>
// kernel: tpu_custom_call.1
$region0: #{tpu_custom_call.1}
  #allocation0 [shape = 'u32[]', space=smem, size = 0x4, offset = 0x4, fixed_abs, tag = 'smem constant byte address 0x4 - core index']
  #allocation1 [shape = 'u32[144,128]{1,0:T(1,128)}', space=vmem, size = 0x12000, scoped, tag = 'internal scratch']
  %s0 = inlined_call_operand.vmem [shape: f32[8,128], index: 0, kind: input, shape index: {}]
  %s1 = inlined_call_operand.vmem [shape: f32[8,128], index: 1, kind: input, shape index: {}]
  %s2 = inlined_call_operand.vmem [shape: f32[8,1], index: 2, kind: input, shape index: {}]
  %s3 = inlined_call_operand.vmem [shape: f32[1,8], index: 3, kind: input, shape index: {}]
  %s4 = inlined_call_operand.vmem [shape: f32[16,128], index: 4, kind: input, shape index: {}]
  %s5 = inlined_call_operand.hbm [shape: f32[128,128], index: 5, kind: input, shape index: {}]
  %s6 = inlined_call_operand.vmem [shape: s32[16,1], index: 6, kind: input, shape index: {}]
  %s7 = inlined_call_operand.vmem [shape: f32[16,1], index: 7, kind: input, shape index: {}]
  %s8 = inlined_call_operand.hbm [shape: f32[1,1], index: 8, kind: output, shape index: {}]
  %s9 = sld [smem:[#allocation0]]
  $region46: #{tpu_custom_call.1} parent=0
    _
  %s11 = ssub.s32 1, %s9
  %s12 = scalar_select 0, %s11, %s9
  $region1: #{tpu_custom_call.1} parent=0
    #allocation2 [shape = 'u8[65536]{0}', space=vmem, size = 0x10000, scoped, tag = 'input window, operand 5, single buffered']
    #allocation3 [shape = 's32[1]{0}', space=sflag, size = 0x4, scoped, tag = 'scoped memory for tpu_custom_call.1']
    #allocation4 [shape = 's32[1]{0}', space=sflag, size = 0x4, scoped, tag = 'scoped memory for tpu_custom_call.1']
    #allocation5 [shape = 'u8[512]{0}', space=vmem, size = 0x400, scoped, tag = 'output window, operand 0, single buffered']
    %13 = vsyncpa [#allocation3], 0
    %14 = vsyncpa [#allocation4], 0
    // Predicated region
    $region2: #{tpu_custom_call.1} parent=1 // pred_check
      _
    $region3: #{tpu_custom_call.1} parent=1 // pred_check_branch
      %16 = sbr.rel (0) target = $region5
    $region4: #{tpu_custom_call.1} parent=1 // pred_region
      _
    $region5: #{tpu_custom_call.1} parent=1 // pred_fallthru
      _
    // Predicated region
    $region6: #{tpu_custom_call.1} parent=1 // pred_check
      _
    $region7: #{tpu_custom_call.1} parent=1 // pred_check_branch
      %18 = sbr.rel (0) target = $region9
    $region8: #{tpu_custom_call.1} parent=1 // pred_region
      _
    $region9: #{tpu_custom_call.1} parent=1 // pred_fallthru
      _
    // Predicated region
    $region10: #{tpu_custom_call.1} parent=1 // pred_check
      _
    $region11: #{tpu_custom_call.1} parent=1 // pred_check_branch
      %20 = sbr.rel (0) target = $region13
    $region12: #{tpu_custom_call.1} parent=1 // pred_region
      _
    $region13: #{tpu_custom_call.1} parent=1 // pred_fallthru
      _
    // Predicated region
    $region14: #{tpu_custom_call.1} parent=1 // pred_check
      _
    $region15: #{tpu_custom_call.1} parent=1 // pred_check_branch
      %22 = sbr.rel (0) target = $region17
    $region16: #{tpu_custom_call.1} parent=1 // pred_region
      _
    $region17: #{tpu_custom_call.1} parent=1 // pred_fallthru
      _
    // Predicated region
    $region18: #{tpu_custom_call.1} parent=1 // pred_check
      _
    $region19: #{tpu_custom_call.1} parent=1 // pred_check_branch
      %24 = sbr.rel (0) target = $region21
    $region20: #{tpu_custom_call.1} parent=1 // pred_region
      _
    $region21: #{tpu_custom_call.1} parent=1 // pred_fallthru
      _
    // Predicated region
    $region22: #{tpu_custom_call.1} parent=1 // pred_check
      _
    $region23: #{tpu_custom_call.1} parent=1 // pred_check_branch
      %26 = sbr.rel (0) target = $region25
    $region24: #{tpu_custom_call.1} parent=1 // pred_region
      %s28 = ssub.s32 2048, 2048
      %29 = vsyncadd [#allocation3], %s28
      %s30 = sshll.u32 [#allocation2], 4
      %s31 = int_to_ptr.vmem [resolvable:$true] %s30
      %36 = dma.hbm_to_vmem [thread:$0]  %s5, 2048, %s31, [#allocation3], 128, 128, 8
    $region25: #{tpu_custom_call.1} parent=1 // pred_fallthru
      _
    // Predicated region
    $region26: #{tpu_custom_call.1} parent=1 // pred_check
      _
    $region27: #{tpu_custom_call.1} parent=1 // pred_check_branch
      %38 = sbr.rel (0) target = $region29
    $region28: #{tpu_custom_call.1} parent=1 // pred_region
      _
    $region29: #{tpu_custom_call.1} parent=1 // pred_fallthru
      _
    // Predicated region
    $region30: #{tpu_custom_call.1} parent=1 // pred_check
      _
    $region31: #{tpu_custom_call.1} parent=1 // pred_check_branch
      %40 = sbr.rel (0) target = $region33
    $region32: #{tpu_custom_call.1} parent=1 // pred_region
      _
    $region33: #{tpu_custom_call.1} parent=1 // pred_fallthru
      _
    // Predicated region
    $region34: #{tpu_custom_call.1} parent=1 // pred_check
      _
    $region35: #{tpu_custom_call.1} parent=1 // pred_check_branch
      %42 = sbr.rel (0) target = $region37
    $region36: #{tpu_custom_call.1} parent=1 // pred_region
      %43 = dma.done [#allocation3], 2048
    $region37: #{tpu_custom_call.1} parent=1 // pred_fallthru
      _
    %v44 = vld [vmem:[%s0] sm:$0xff]
    %v45 = vld [vmem:[%s1] sm:$0xff]
    %v46 = vld [vmem:[%s2] sm:$0xff]
    %v47 = vld [vmem:[%s3] sm:$0x1]
    %vm48 = vcmask 7168
    %v49 = vsel %vm48, %v46, 0.0
    %50 = vadd.xlane.f32.xlu0 %v49
    %v51 = vpop.xlane.xlu0 %50
    %v52 = vrot.slane %v51, 4
    %v53 = vadd.f32 %v51, %v52
    %v54 = vrot.slane %v53, 2
    %v55 = vadd.f32 %v53, %v54
    %v56 = vrot.slane %v55, 1
    %v57 = vadd.f32 %v55, %v56
    %s58 = vtos %v57
    %v59 = vstv %s58
    %v60 = vsub.f32 8.0, %v59
    %v61 = vrcp.pop %v59
    %v62 = vmul.f32 1.0, %v61
    %v63 = vrcp.pop %v60
    %v64 = vmul.f32 1.0, %v63
    %v65 = vmul.f32 %v44, %v45
    %66 = vadd.xlane.f32.xlu0 %v65
    %v67 = vpop.xlane.xlu0 %66
    %vm68 = vcmp.gt.f32.partialorder %v46, 0.5
    %vm69 = vcmp.lt.f32.partialorder %v47, 0.5
    %v70 = vsel %vm68, 1, 0
    %71 = vset.pattern.permute.xlu0 0
    %72 = vperm.xlu0 %71, %v70
    %v73 = vpop.permute.xlu0 %72
    %vm74 = vcmp.eq.s32.totalorder %v73, 1
    %v75 = vsel %vm69, 1, 0
    %v76 = vlaneseq
    %v77 = vshrl.u32 %v76, 7
    %v78 = vsub.s32 0, %v77
    %v79 = vrot.slane %v75, %v78
    %vm80 = vcmp.eq.s32.totalorder %v79, 1
    %vm81 = vmand %vm74, %vm80
    %82 = vmatprep.subr.mxu0 0.0
    %83 = vmatpush1.xpose.msra.mxu0 %v45
    %84 = vmatprep.subr.mxu0 0.0
    %85 = vmatpush1.xpose.msra.mxu0 0.0
    %86 = vmatprep.subr.mxu0 0.0
    %87 = vmatpush1.xpose.msra.mxu0 0.0
    %88 = vmatprep.subr.mxu0 0.0
    %89 = vmatpush1.xpose.msra.mxu0 0.0
    %90 = vmatprep.subr.mxu0 0.0
    %91 = vmatpush1.xpose.msra.mxu0 0.0
    %92 = vmatprep.subr.mxu0 0.0
    %93 = vmatpush1.xpose.msra.mxu0 0.0
    %94 = vmatprep.subr.mxu0 0.0
    %95 = vmatpush1.xpose.msra.mxu0 0.0
    %96 = vmatprep.subr.mxu0 0.0
    %97 = vmatpush1.xpose.msra.mxu0 0.0
    %98 = vmatprep.subr.mxu0 0.0
    %99 = vmatpush1.xpose.msra.mxu0 0.0
    %100 = vmatprep.subr.mxu0 0.0
    %101 = vmatpush1.xpose.msra.mxu0 0.0
    %102 = vmatprep.subr.mxu0 0.0
    %103 = vmatpush1.xpose.msra.mxu0 0.0
    %104 = vmatprep.subr.mxu0 0.0
    %105 = vmatpush1.xpose.msra.mxu0 0.0
    %106 = vmatprep.subr.mxu0 0.0
    %107 = vmatpush1.xpose.msra.mxu0 0.0
    %108 = vmatprep.subr.mxu0 0.0
    %109 = vmatpush1.xpose.msra.mxu0 0.0
    %110 = vmatprep.subr.mxu0 0.0
    %111 = vmatpush1.xpose.msra.mxu0 0.0
    %112 = vmatprep.subr.mxu0 0.0
    %113 = vmatpush1.xpose.msra.mxu0 0.0
    %114 = vmatprep.subr.mxu0 0.0
    %115 = vmatpush1.xpose.msra.mxu0 0.0
    %116 = vmatprep.subr.mxu0 0.0
    %117 = vmatpush1.xpose.msra.mxu0 0.0
    %118 = vmatprep.subr.mxu0 0.0
    %119 = vmatpush1.xpose.msra.mxu0 0.0
    %120 = vmatprep.subr.mxu0 0.0
    %121 = vmatpush1.xpose.msra.mxu0 0.0
    %122 = vmatprep.subr.mxu0 0.0
    %123 = vmatpush1.xpose.msra.mxu0 0.0
    %124 = vmatprep.subr.mxu0 0.0
    %125 = vmatpush1.xpose.msra.mxu0 0.0
    %126 = vmatprep.subr.mxu0 0.0
    %127 = vmatpush1.xpose.msra.mxu0 0.0
    %128 = vmatprep.subr.mxu0 0.0
    %129 = vmatpush1.xpose.msra.mxu0 0.0
    %130 = vmatprep.subr.mxu0 0.0
    %131 = vmatpush1.xpose.msra.mxu0 0.0
    %132 = vmatprep.subr.mxu0 0.0
    %133 = vmatpush1.xpose.msra.mxu0 0.0
    %134 = vmatprep.subr.mxu0 0.0
    %135 = vmatpush1.xpose.msra.mxu0 0.0
    %136 = vmatprep.subr.mxu0 0.0
    %137 = vmatpush1.xpose.msra.mxu0 0.0
    %138 = vmatprep.subr.mxu0 0.0
    %139 = vmatpush1.xpose.msra.mxu0 0.0
    %140 = vmatprep.subr.mxu0 0.0
    %141 = vmatpush1.xpose.msra.mxu0 0.0
    %142 = vmatprep.subr.mxu0 0.0
    %143 = vmatpush1.xpose.msra.mxu0 0.0
    %144 = vmatprep.subr.mxu0 0.0
    %145 = vmatpush1.xpose.msra.mxu0 0.0
    %146 = vmatprep.mubr.f32.mxu0 0.0
    %147 = vmatmul.mubr.f32.gmra.mrb[0].mxu0 %v44
    %v148 = vpop.f32.mrb[0].mxu0
    %v149 = vadd.f32 0.0, %v148
    %v150 = vpop.f32.mrb[0].mxu0
    %151 = vdwg.mxu0
    %v152 = vsub.f32 %v149, %v67
    %v153 = vmul.f32 %v152, 14.285714
    %v154 = vmin.f32 %v153, 80.0
    %v155 = vmul.f32 %v154, 1.442695
    %v156 = vpow.pop %v155
    %v157 = vsel %vm81, %v156, 0.0
    %vm158 = vcmask 64512
    %v159 = vsel %vm158, %v157, 0.0
    %160 = vadd.xlane.f32.xlu0 %v159
    %v161 = vpop.xlane.xlu0 %160
    %v162 = vmul.f32 %v157, %v152
    %v163 = vsel %vm158, %v162, 0.0
    %164 = vadd.xlane.f32.xlu0 %v163
    %v165 = vpop.xlane.xlu0 %164
    %v166 = vmul.f32 %v161, %v64
    %v167 = vadd.f32 %v166, 1.1920929e-07
    %v168 = vrcp.pop %v167
    %v169 = vmul.f32 %v165, %v168
    %v170 = vmul.f32 %v169, %v64
    %v171 = vmul.f32 %v170, %v46
    %v172 = vsel %vm48, %v171, 0.0
    %173 = vadd.xlane.f32.xlu0 %v172
    %v174 = vpop.xlane.xlu0 %173
    %v175 = vrot.slane %v174, 4
    %v176 = vadd.f32 %v174, %v175
    %v177 = vrot.slane %v176, 2
    %v178 = vadd.f32 %v176, %v177
    %v179 = vrot.slane %v178, 1
    %v180 = vadd.f32 %v178, %v179
    %s181 = vtos %v180
    %v182 = vstv %s181
    %v183 = vmul.f32 %v182, %v62
    %184 = vmatprep.subr.mxu0 0.0
    %185 = vmatpush1.xpose.msra.mxu0 %v44
    %186 = vmatprep.subr.mxu0 0.0
    %187 = vmatpush1.xpose.msra.mxu0 0.0
    %188 = vmatprep.subr.mxu0 0.0
    %189 = vmatpush1.xpose.msra.mxu0 0.0
    %190 = vmatprep.subr.mxu0 0.0
    %191 = vmatpush1.xpose.msra.mxu0 0.0
    %192 = vmatprep.subr.mxu0 0.0
    %193 = vmatpush1.xpose.msra.mxu0 0.0
    %194 = vmatprep.subr.mxu0 0.0
    %195 = vmatpush1.xpose.msra.mxu0 0.0
    %196 = vmatprep.subr.mxu0 0.0
    %197 = vmatpush1.xpose.msra.mxu0 0.0
    %198 = vmatprep.subr.mxu0 0.0
    %199 = vmatpush1.xpose.msra.mxu0 0.0
    %200 = vmatprep.subr.mxu0 0.0
    %201 = vmatpush1.xpose.msra.mxu0 0.0
    %202 = vmatprep.subr.mxu0 0.0
    %203 = vmatpush1.xpose.msra.mxu0 0.0
    %204 = vmatprep.subr.mxu0 0.0
    %205 = vmatpush1.xpose.msra.mxu0 0.0
    %206 = vmatprep.subr.mxu0 0.0
    %207 = vmatpush1.xpose.msra.mxu0 0.0
    %208 = vmatprep.subr.mxu0 0.0
    %209 = vmatpush1.xpose.msra.mxu0 0.0
    %210 = vmatprep.subr.mxu0 0.0
    %211 = vmatpush1.xpose.msra.mxu0 0.0
    %212 = vmatprep.subr.mxu0 0.0
    %213 = vmatpush1.xpose.msra.mxu0 0.0
    %214 = vmatprep.subr.mxu0 0.0
    %215 = vmatpush1.xpose.msra.mxu0 0.0
    %216 = vmatprep.subr.mxu0 0.0
    %217 = vmatpush1.xpose.msra.mxu0 0.0
    %218 = vmatprep.subr.mxu0 0.0
    %219 = vmatpush1.xpose.msra.mxu0 0.0
    %220 = vmatprep.subr.mxu0 0.0
    %221 = vmatpush1.xpose.msra.mxu0 0.0
    %222 = vmatprep.subr.mxu0 0.0
    %223 = vmatpush1.xpose.msra.mxu0 0.0
    %224 = vmatprep.subr.mxu0 0.0
    %225 = vmatpush1.xpose.msra.mxu0 0.0
    %226 = vmatprep.subr.mxu0 0.0
    %227 = vmatpush1.xpose.msra.mxu0 0.0
    %228 = vmatprep.subr.mxu0 0.0
    %229 = vmatpush1.xpose.msra.mxu0 0.0
    %230 = vmatprep.subr.mxu0 0.0
    %231 = vmatpush1.xpose.msra.mxu0 0.0
    %232 = vmatprep.subr.mxu0 0.0
    %233 = vmatpush1.xpose.msra.mxu0 0.0
    %234 = vmatprep.subr.mxu0 0.0
    %235 = vmatpush1.xpose.msra.mxu0 0.0
    %236 = vmatprep.subr.mxu0 0.0
    %237 = vmatpush1.xpose.msra.mxu0 0.0
    %238 = vmatprep.subr.mxu0 0.0
    %239 = vmatpush1.xpose.msra.mxu0 0.0
    %240 = vmatprep.subr.mxu0 0.0
    %241 = vmatpush1.xpose.msra.mxu0 0.0
    %242 = vmatprep.subr.mxu0 0.0
    %243 = vmatpush1.xpose.msra.mxu0 0.0
    %244 = vmatprep.subr.mxu0 0.0
    %245 = vmatpush1.xpose.msra.mxu0 0.0
    %246 = vmatprep.subr.mxu0 0.0
    %247 = vmatpush1.xpose.msra.mxu0 0.0
    %248 = vmatprep.mubr.f32.mxu0 0.0
    %249 = vmatmul.mubr.f32.gmra.mrb[0].mxu0 %v45
    %v250 = vpop.f32.mrb[0].mxu0
    %v251 = vadd.f32 0.0, %v250
    %v252 = vpop.f32.mrb[0].mxu0
    %253 = vdwg.mxu0
    %v254 = vsub.f32 %v251, %v67
    %v255 = vmul.f32 %v254, 14.285714
    %v256 = vmin.f32 %v255, 80.0
    %v257 = vmul.f32 %v256, 1.442695
    %v258 = vpow.pop %v257
    %v259 = vsel %vm81, %v258, 0.0
    %v260 = vsel %vm158, %v259, 0.0
    %261 = vadd.xlane.f32.xlu0 %v260
    %v262 = vpop.xlane.xlu0 %261
    %v263 = vmul.f32 %v259, %v254
    %v264 = vsel %vm158, %v263, 0.0
    %265 = vadd.xlane.f32.xlu0 %v264
    %v266 = vpop.xlane.xlu0 %265
    %v267 = vmul.f32 %v262, %v64
    %v268 = vadd.f32 %v267, 1.1920929e-07
    %v269 = vrcp.pop %v268
    %v270 = vmul.f32 %v266, %v269
    %v271 = vmul.f32 %v270, %v64
    %v272 = vmul.f32 %v271, %v46
    %v273 = vsel %vm48, %v272, 0.0
    %274 = vadd.xlane.f32.xlu0 %v273
    %v275 = vpop.xlane.xlu0 %274
    %v276 = vrot.slane %v275, 4
    %v277 = vadd.f32 %v275, %v276
    %v278 = vrot.slane %v277, 2
    %v279 = vadd.f32 %v277, %v278
    %v280 = vrot.slane %v279, 1
    %v281 = vadd.f32 %v279, %v280
    %s282 = vtos %v281
    %v283 = vstv %s282
    %v284 = vmul.f32 %v283, %v62
    %v285 = vadd.f32 %v183, %v284
    %v286 = vld [vmem:[%s4] sm:$0xff]
    %v287 = vld [vmem:[%s4 + $0x8] sm:$0xff]
    %v288 = vld [vmem:[#allocation2] sm:$0xff]
    %v289 = vld [vmem:[#allocation2 + $0x8] sm:$0xff]
    %v290 = vld [vmem:[#allocation2 + $0x10] sm:$0xff]
    %v291 = vld [vmem:[#allocation2 + $0x18] sm:$0xff]
    %v292 = vld [vmem:[#allocation2 + $0x20] sm:$0xff]
    %v293 = vld [vmem:[#allocation2 + $0x28] sm:$0xff]
    %v294 = vld [vmem:[#allocation2 + $0x30] sm:$0xff]
    %v295 = vld [vmem:[#allocation2 + $0x38] sm:$0xff]
    %v296 = vld [vmem:[#allocation2 + $0x40] sm:$0xff]
    %v297 = vld [vmem:[#allocation2 + $0x48] sm:$0xff]
    %v298 = vld [vmem:[#allocation2 + $0x50] sm:$0xff]
    %v299 = vld [vmem:[#allocation2 + $0x58] sm:$0xff]
    %v300 = vld [vmem:[#allocation2 + $0x60] sm:$0xff]
    %v301 = vld [vmem:[#allocation2 + $0x68] sm:$0xff]
    %v302 = vld [vmem:[#allocation2 + $0x70] sm:$0xff]
    %v303 = vld [vmem:[#allocation2 + $0x78] sm:$0xff]
    %v304 = vld [vmem:[%s6] sm:$0xff]
    %v305 = vld [vmem:[%s6 + $0x8] sm:$0xff]
    %v306 = vld [vmem:[%s7] sm:$0xff]
    %v307 = vld [vmem:[%s7 + $0x8] sm:$0xff]
    %308 = vmatprep.subr.mxu0 0.0
    %309 = vmatpush1.xpose.msra.mxu0 %v288
    %310 = vmatprep.subr.mxu0 0.0
    %311 = vmatpush1.xpose.msra.mxu0 %v289
    %312 = vmatprep.subr.mxu0 0.0
    %313 = vmatpush1.xpose.msra.mxu0 %v290
    %314 = vmatprep.subr.mxu0 0.0
    %315 = vmatpush1.xpose.msra.mxu0 %v291
    %316 = vmatprep.subr.mxu0 0.0
    %317 = vmatpush1.xpose.msra.mxu0 %v292
    %318 = vmatprep.subr.mxu0 0.0
    %319 = vmatpush1.xpose.msra.mxu0 %v293
    %320 = vmatprep.subr.mxu0 0.0
    %321 = vmatpush1.xpose.msra.mxu0 %v294
    %322 = vmatprep.subr.mxu0 0.0
    %323 = vmatpush1.xpose.msra.mxu0 %v295
    %324 = vmatprep.subr.mxu0 0.0
    %325 = vmatpush1.xpose.msra.mxu0 %v296
    %326 = vmatprep.subr.mxu0 0.0
    %327 = vmatpush1.xpose.msra.mxu0 %v297
    %328 = vmatprep.subr.mxu0 0.0
    %329 = vmatpush1.xpose.msra.mxu0 %v298
    %330 = vmatprep.subr.mxu0 0.0
    %331 = vmatpush1.xpose.msra.mxu0 %v299
    %332 = vmatprep.subr.mxu0 0.0
    %333 = vmatpush1.xpose.msra.mxu0 %v300
    %334 = vmatprep.subr.mxu0 0.0
    %335 = vmatpush1.xpose.msra.mxu0 %v301
    %336 = vmatprep.subr.mxu0 0.0
    %337 = vmatpush1.xpose.msra.mxu0 %v302
    %338 = vmatprep.subr.mxu0 0.0
    %339 = vmatpush1.xpose.msra.mxu0 %v303
    %340 = vmatprep.subr.mxu0 0.0
    %341 = vmatpush1.xpose.msra.mxu0 0.0
    %342 = vmatprep.subr.mxu0 0.0
    %343 = vmatpush1.xpose.msra.mxu0 0.0
    %344 = vmatprep.subr.mxu0 0.0
    %345 = vmatpush1.xpose.msra.mxu0 0.0
    %346 = vmatprep.subr.mxu0 0.0
    %347 = vmatpush1.xpose.msra.mxu0 0.0
    %348 = vmatprep.subr.mxu0 0.0
    %349 = vmatpush1.xpose.msra.mxu0 0.0
    %350 = vmatprep.subr.mxu0 0.0
    %351 = vmatpush1.xpose.msra.mxu0 0.0
    %352 = vmatprep.subr.mxu0 0.0
    %353 = vmatpush1.xpose.msra.mxu0 0.0
    %354 = vmatprep.subr.mxu0 0.0
    %355 = vmatpush1.xpose.msra.mxu0 0.0
    %356 = vmatprep.subr.mxu0 0.0
    %357 = vmatpush1.xpose.msra.mxu0 0.0
    %358 = vmatprep.subr.mxu0 0.0
    %359 = vmatpush1.xpose.msra.mxu0 0.0
    %360 = vmatprep.subr.mxu0 0.0
    %361 = vmatpush1.xpose.msra.mxu0 0.0
    %362 = vmatprep.subr.mxu0 0.0
    %363 = vmatpush1.xpose.msra.mxu0 0.0
    %364 = vmatprep.subr.mxu0 0.0
    %365 = vmatpush1.xpose.msra.mxu0 0.0
    %366 = vmatprep.subr.mxu0 0.0
    %367 = vmatpush1.xpose.msra.mxu0 0.0
    %368 = vmatprep.subr.mxu0 0.0
    %369 = vmatpush1.xpose.msra.mxu0 0.0
    %370 = vmatprep.subr.mxu0 0.0
    %371 = vmatpush1.xpose.msra.mxu0 0.0
    %372 = vmatprep.mubr.f32.mxu0 0.0
    %373 = vmatmul.mubr.f32.gmra.mrb[0].mxu0 %v286
    %v374 = vpop.f32.mrb[0].mxu0
    %v375 = vadd.f32 0.0, %v374
    %v376 = vpop.f32.mrb[0].mxu0
    %377 = vmatprep.mubr.f32.mxu0 0.0
    %378 = vmatmul.mubr.f32.gmra.mrb[0].mxu0 %v287
    %v379 = vpop.f32.mrb[0].mxu0
    %v380 = vadd.f32 0.0, %v379
    %v381 = vpop.f32.mrb[0].mxu0
    %382 = vdwg.mxu0
    %v383 = vmul.f32 %v375, 10.0
    %v384 = vmul.f32 %v380, 10.0
    %v385 = vlaneseq
    %v386 = vand.u32 %v385, 127
    %vm387 = vcmp.lt.s32.totalorder %v386, 5
    %v388 = vsel %vm387, %v383, -1e+30
    %v389 = vsel %vm387, %v384, -1e+30
    %390 = vset.pattern.permute.xlu0 0
    %391 = vperm.xlu0 %390, %v304
    %v392 = vpop.permute.xlu0 %391
    %393 = vset.pattern.permute.xlu0 0
    %394 = vperm.xlu0 %393, %v305
    %v395 = vpop.permute.xlu0 %394
    %vm396 = vcmp.eq.s32.totalorder %v386, %v392
    %vm397 = vcmp.eq.s32.totalorder %v386, %v395
    %v398 = vsel %vm396, 1, 0
    %v399 = vsel %vm397, 1, 0
    %v400 = vcvt.s32.f32 %v398
    %v401 = vcvt.s32.f32 %v399
    %402 = vmax.xlane.f32.xlu0 %v388
    %v403 = vpop.xlane.xlu0 %402
    %404 = vmax.xlane.f32.xlu0 %v389
    %v405 = vpop.xlane.xlu0 %404
    %v406 = vsub.f32 %v388, %v403
    %v407 = vsub.f32 %v389, %v405
    %v408 = vmul.f32 %v406, 1.442695
    %v409 = vpow.pop %v408
    %v410 = vmul.f32 %v407, 1.442695
    %v411 = vpow.pop %v410
    %412 = vadd.xlane.f32.xlu0 %v409
    %v413 = vpop.xlane.xlu0 %412
    %414 = vadd.xlane.f32.xlu0 %v411
    %v415 = vpop.xlane.xlu0 %414
    %v416 = vlog2.pop %v413
    %v417 = vmul.f32 %v416, 0.6931472
    %v418 = vlog2.pop %v415
    %v419 = vmul.f32 %v418, 0.6931472
    %v420 = vadd.f32 %v417, %v403
    %v421 = vadd.f32 %v419, %v405
    %v422 = vmul.f32 %v400, %v388
    %v423 = vmul.f32 %v401, %v389
    %424 = vadd.xlane.f32.xlu0 %v422
    %v425 = vpop.xlane.xlu0 %424
    %426 = vadd.xlane.f32.xlu0 %v423
    %v427 = vpop.xlane.xlu0 %426
    %v428 = vsub.f32 %v420, %v425
    %v429 = vsub.f32 %v421, %v427
    %v430 = vadd.f32 %v400, %v401
    %v431 = vrot.slane %v430, 4
    %v432 = vadd.f32 %v430, %v431
    %v433 = vrot.slane %v432, 2
    %v434 = vadd.f32 %v432, %v433
    %v435 = vrot.slane %v434, 1
    %v436 = vadd.f32 %v434, %v435
    %vm437 = vcmp.gt.f32.partialorder %v436, 0.0
    %v438 = vsel %vm437, %v436, 1.0
    %v439 = vrcp.pop %v438
    %v440 = vmul.f32 %v400, %v428
    %v441 = vmul.f32 %v401, %v429
    %v442 = vadd.f32 %v440, %v441
    %v443 = vrot.slane %v442, 4
    %v444 = vadd.f32 %v442, %v443
    %v445 = vrot.slane %v444, 2
    %v446 = vadd.f32 %v444, %v445
    %v447 = vrot.slane %v446, 1
    %v448 = vadd.f32 %v446, %v447
    %v449 = vmul.f32 %v448, %v439
    %451 = vset.pattern.permute.xlu0 0
    %452 = vperm.xlu0 %451, %v306
    %v453 = vpop.permute.xlu0 %452
    %456 = vset.pattern.permute.xlu0 0
    %457 = vperm.xlu0 %456, %v307
    %v458 = vpop.permute.xlu0 %457
    %v460 = vmul.f32 %v400, %v453
    %v461 = vmul.f32 %v401, %v458
    %v462 = vadd.f32 %v460, %v461
    %v463 = vrot.slane %v462, 4
    %v464 = vadd.f32 %v462, %v463
    %v465 = vrot.slane %v464, 2
    %v466 = vadd.f32 %v464, %v465
    %v467 = vrot.slane %v466, 1
    %v468 = vadd.f32 %v466, %v467
    %v469 = vmul.f32 %v468, %v439
    %v470 = vsub.f32 %v449, %v469
    %vm471 = vcmp.gt.f32.partialorder %v470, 0.0
    %v472 = vsel %vm471, 40.0, 0.0
    %v473 = vmul.f32 %v472, %v449
    %v474 = vmul.f32 %v473, 0.1
    %v475 = vsel %vm437, 1, 0
    %v476 = vcvt.s32.f32 %v475
    %vm477 = vcmask 1040384
    %v478 = vsel %vm477, %v476, 0.0
    %479 = vadd.xlane.f32.xlu0 %v478
    %v480 = vpop.xlane.xlu0 %479
    %v481 = vrot.slane %v480, 4
    %v482 = vadd.f32 %v480, %v481
    %v483 = vrot.slane %v482, 2
    %v484 = vadd.f32 %v482, %v483
    %v485 = vrot.slane %v484, 1
    %v486 = vadd.f32 %v484, %v485
    %s487 = vtos %v486
    %v488 = vstv %s487
    %v489 = vsel %vm437, %v474, 0.0
    %v490 = vsel %vm477, %v489, 0.0
    %491 = vadd.xlane.f32.xlu0 %v490
    %v492 = vpop.xlane.xlu0 %491
    %v493 = vrot.slane %v492, 4
    %v494 = vadd.f32 %v492, %v493
    %v495 = vrot.slane %v494, 2
    %v496 = vadd.f32 %v494, %v495
    %v497 = vrot.slane %v496, 1
    %v498 = vadd.f32 %v496, %v497
    %s499 = vtos %v498
    %v500 = vstv %s499
    %v501 = vrcp.pop %v488
    %v502 = vmul.f32 %v500, %v501
    %v503 = vadd.f32 %v285, %v502
    %vm504 = vcmask 0
    %505 = vst.msk [vmem:[#allocation5] sm:$0x1] %vm504, %v503
    // Predicated region
    $region38: #{tpu_custom_call.1} parent=1 // pred_check
      _
    $region39: #{tpu_custom_call.1} parent=1 // pred_check_branch
      %507 = sbr.rel (0) target = $region41
    $region40: #{tpu_custom_call.1} parent=1 // pred_region
      %s509 = ssub.s32 16, 16
      %510 = vsyncadd [#allocation4], %s509
      %s512 = sshll.u32 [#allocation5], 4
      %s513 = int_to_ptr.vmem [resolvable:$true] %s512
      %515 = dma.vmem_to_hbm [thread:$0]  %s513, 16, %s8, [#allocation4]
    $region41: #{tpu_custom_call.1} parent=1 // pred_fallthru
      _
    // Predicated region
    $region42: #{tpu_custom_call.1} parent=1 // pred_check
      _
    $region43: #{tpu_custom_call.1} parent=1 // pred_check_branch
      %517 = sbr.rel (0) target = $region45
    $region44: #{tpu_custom_call.1} parent=1 // pred_region
      %518 = dma.done [#allocation4], 16
    $region45: #{tpu_custom_call.1} parent=1 // pred_fallthru
      _
    %519 = vsyncpa [#allocation3], 1
    %520 = vsyncpa [#allocation4], 1

</llo_original>
